<compile_context>
chip_gen: v5e
topology: v5e:2x2
jax: 0.10.0
libtpu: 0.0.40
codegen_flags: <defaults>
</compile_context>

<pallas_src>
import functools

import jax
import jax.numpy as jnp
from jax import lax
from jax.experimental import pallas as pl
from jax.experimental.pallas import tpu as pltpu


def _residual_stack_kernel(x_ref, w3_ref, w1_ref, o_ref, *, H, W, L):
    """One grid step = one batch image, all residual layers fused.

    x_ref:  (C, H*W)        input image, channels on sublanes, pixels on lanes
    w3_ref: (L, C_rh, 9*C)  3x3 conv weights, flattened tap-major along K
    w1_ref: (L, C, C_rh)    1x1 conv weights
    o_ref:  (C, H*W)        output image
    """
    C, HW = x_ref.shape

    x = x_ref[...].astype(jnp.float32)                       # (C, HW)
    w3 = w3_ref[...].astype(jnp.float32)                     # (L, C_rh, 9C)
    w1 = w1_ref[...].astype(jnp.float32)                     # (L, C, C_rh)

    # Column-boundary masks, hoisted ONCE and reused by every tap and layer.
    pos = lax.broadcasted_iota(jnp.int32, (C, HW), 1)
    col = pos % W
    keep_src_right = col < (W - 1)    # source column c+1 is in-bounds
    keep_src_left = col >= 1          # source column c-1 is in-bounds

    def zshift(a, delta):
        # result[:, p] == a[:, p + delta], zero-filled outside [0, HW).
        # The zero fill implements the row component of padding=1 exactly
        # (given the column mask), so no row mask is needed.
        if delta == 0:
            return a
        if delta > 0:
            pad = jnp.zeros((C, delta), jnp.float32)
            return jnp.concatenate([a[:, delta:], pad], axis=1)
        pad = jnp.zeros((C, -delta), jnp.float32)
        return jnp.concatenate([pad, a[:, :delta]], axis=1)

    # num_residual_layers is small and static -> unroll in Python.
    for layer in range(L):
        h = jnp.maximum(x, 0.0)                               # ReLU
        # Build the 9 shifted taps, stacked along sublanes: (9C, HW).
        taps = []
        for kh in range(3):
            dh = kh - 1
            for kw in range(3):
                dw = kw - 1
                t = zshift(h, dh * W + dw)
                if dw == 1:
                    t = jnp.where(keep_src_right, t, 0.0)
                elif dw == -1:
                    t = jnp.where(keep_src_left, t, 0.0)
                taps.append(t)
        stacked = jnp.concatenate(taps, axis=0)               # (9C, HW)
        # 3x3 conv (padding=1, stride=1, no bias) as ONE matmul with K=9C.
        pre = jnp.dot(w3[layer], stacked,
                      preferred_element_type=jnp.float32)     # (C_rh, HW)
        t3 = jnp.maximum(pre, 0.0)                            # ReLU
        # 1x1 conv (no bias): (C, C_rh) @ (C_rh, HW), then residual add.
        x = x + jnp.dot(w1[layer], t3,
                        preferred_element_type=jnp.float32)

    o_ref[...] = jnp.maximum(x, 0.0).astype(o_ref.dtype)      # final ReLU


def residual_stack_forward(x_nchw, w3_stack, w1_stack):
    """Forward of ResidualStack.

    x_nchw:   (B, C, H, W)
    w3_stack: (L, C_rh, C, 3, 3)   Conv2d(C, C_rh, k=3, p=1, bias=False) weights
    w1_stack: (L, C, C_rh)         Conv2d(C_rh, C, k=1, bias=False) weights
    """
    B, C, H, W = x_nchw.shape
    L, C_rh, C_in, kh, kw = w3_stack.shape
    assert C_in == C and kh == 3 and kw == 3
    assert w1_stack.shape == (L, C, C_rh)
    HW = H * W

    # Free layout-preserving reshape: channels -> sublanes, pixels -> lanes.
    x_flat = x_nchw.reshape(B, C, HW)
    # One-time weight re-layout: (L, C_rh, C, 3, 3) -> (L, C_rh, 3, 3, C)
    # -> (L, C_rh, 9*C), tap-major along the contraction axis (t = 3*kh + kw).
    w3_k = jnp.transpose(w3_stack, (0, 1, 3, 4, 2)).reshape(L, C_rh, 9 * C)

    kernel = functools.partial(_residual_stack_kernel, H=H, W=W, L=L)

    out_flat = pl.pallas_call(
        kernel,
        out_shape=jax.ShapeDtypeStruct((B, C, HW), x_nchw.dtype),
        grid_spec=pltpu.PrefetchScalarGridSpec(
            num_scalar_prefetch=0,
            grid=(B,),
            in_specs=[
                pl.BlockSpec((None, C, HW), lambda b: (b, 0, 0)),
                pl.BlockSpec((L, C_rh, 9 * C), lambda b: (0, 0, 0)),
                pl.BlockSpec((L, C, C_rh), lambda b: (0, 0, 0)),
            ],
            out_specs=pl.BlockSpec((None, C, HW), lambda b: (b, 0, 0)),
        ),
        compiler_params=pltpu.CompilerParams(
            dimension_semantics=("parallel",)),
    )(x_flat, w3_k, w1_stack)

    return out_flat.reshape(B, C, H, W)


def reference_forward(x, w3_stack, w1_stack):
    """Pure-JAX reference (lax convs), mirrors the PyTorch module exactly."""
    dn = ("NCHW", "OIHW", "NCHW")

    def conv3x3(h, w):
        return lax.conv_general_dilated(
            h, w, window_strides=(1, 1), padding=((1, 1), (1, 1)),
            dimension_numbers=dn, precision=lax.Precision.HIGHEST)

    def conv1x1(h, w):
        return lax.conv_general_dilated(
            h, w[..., None, None], window_strides=(1, 1),
            padding=((0, 0), (0, 0)), dimension_numbers=dn,
            precision=lax.Precision.HIGHEST)

    for layer in range(w3_stack.shape[0]):
        h = jax.nn.relu(x)
        t = jax.nn.relu(conv3x3(h, w3_stack[layer]))
        x = x + conv1x1(t, w1_stack[layer])
    return jax.nn.relu(x)


if __name__ == "__main__":
    B, C, H, W = 2, 32, 16, 16           # in_channels == num_hiddens == 32
    num_residual_hiddens = 8
    num_residual_layers = 2

    key = jax.random.PRNGKey(0)
    k_x, k_w3, k_w1 = jax.random.split(key, 3)

    x = jax.random.normal(k_x, (B, C, H, W), jnp.float32)
    # Deterministic stand-ins for the Conv2d weight initializations.
    w3 = 0.1 * jax.random.normal(
        k_w3, (num_residual_layers, num_residual_hiddens, C, 3, 3), jnp.float32)
    w1 = 0.1 * jax.random.normal(
        k_w1, (num_residual_layers, C, num_residual_hiddens), jnp.float32)

    out = jax.jit(residual_stack_forward)(x, w3, w1)
    ref = reference_forward(x, w3, w1)
    jax.block_until_ready((out, ref))

    assert out.shape == x.shape
    err = float(jnp.max(jnp.abs(out - ref)))
    scale = float(jnp.max(jnp.abs(ref))) + 1.0
    assert err <= 1e-2 * scale, f"max abs err {err} vs ref scale {scale}"
    # Final ReLU => output must be non-negative.
    assert bool(jnp.all(out >= 0.0))
    print("KERNEL_OK")
</pallas_src>

<mosaic_0001>
module attributes {stable_mosaic.version = 11 : i64} {
  func.func @_residual_stack_kernel(%arg0: i32, %arg1: memref<1x32x256xf32, #tpu.memory_space<vmem>>, %arg2: memref<2x8x288xf32, #tpu.memory_space<vmem>>, %arg3: memref<2x32x8xf32, #tpu.memory_space<vmem>>, %arg4: memref<1x32x256xf32, #tpu.memory_space<vmem>>) attributes {dimension_semantics = [#tpu.dimension_semantics<parallel>], iteration_bounds = array<i64: 2>, scalar_prefetch = 0 : i64, scratch_operands = 0 : i64, tpu.core_type = #tpu.core_type<tc>, window_params = [{transform_indices = @transform_0, window_bounds = array<i64: 1, 32, 256>}, {pipeline_mode = #tpu.pipeline_mode<synchronous>, transform_indices = @transform_1, window_bounds = array<i64: 2, 8, 288>}, {pipeline_mode = #tpu.pipeline_mode<synchronous>, transform_indices = @transform_2, window_bounds = array<i64: 2, 32, 8>}, {transform_indices = @transform_3, window_bounds = array<i64: 1, 32, 256>}]} {
    %c0 = arith.constant 0 : index
    %c0_0 = arith.constant 0 : index
    %c0_1 = arith.constant 0 : index
    %0 = vector.load %arg1[%c0, %c0_0, %c0_1] : memref<1x32x256xf32, #tpu.memory_space<vmem>>, vector<1x32x256xf32>
    %1 = vector.shape_cast %0 : vector<1x32x256xf32> to vector<32x256xf32>
    %c0_2 = arith.constant 0 : index
    %c0_3 = arith.constant 0 : index
    %c0_4 = arith.constant 0 : index
    %2 = vector.load %arg2[%c0_2, %c0_3, %c0_4] : memref<2x8x288xf32, #tpu.memory_space<vmem>>, vector<2x8x288xf32>
    %c0_5 = arith.constant 0 : index
    %c0_6 = arith.constant 0 : index
    %c0_7 = arith.constant 0 : index
    %3 = vector.load %arg3[%c0_5, %c0_6, %c0_7] : memref<2x32x8xf32, #tpu.memory_space<vmem>>, vector<2x32x8xf32>
    %4 = tpu.iota {dimensions = array<i32: 1>} : vector<32x256xi32>
    %c16_i32 = arith.constant 16 : i32
    %c0_i32 = arith.constant 0 : i32
    %5 = arith.cmpi eq, %c16_i32, %c0_i32 : i32
    %c1_i32 = arith.constant 1 : i32
    %6 = arith.select %5, %c1_i32, %c16_i32 : i32
    %7 = vector.broadcast %6 : i32 to vector<32x256xi32>
    %8 = arith.remsi %4, %7 : vector<32x256xi32>
    %c0_i32_8 = arith.constant 0 : i32
    %9 = vector.broadcast %c0_i32_8 : i32 to vector<32x256xi32>
    %10 = arith.cmpi ne, %8, %9 : vector<32x256xi32>
    %c0_i32_9 = arith.constant 0 : i32
    %11 = vector.broadcast %c0_i32_9 : i32 to vector<32x256xi32>
    %12 = arith.cmpi slt, %8, %11 : vector<32x256xi32>
    %c0_i32_10 = arith.constant 0 : i32
    %13 = arith.cmpi slt, %6, %c0_i32_10 : i32
    %14 = vector.broadcast %13 : i1 to vector<32x256xi1>
    %15 = vector.broadcast %14 : vector<32x256xi1> to vector<32x256xi1>
    %16 = arith.xori %12, %15 : vector<32x256xi1>
    %17 = arith.andi %16, %10 : vector<32x256xi1>
    %18 = vector.broadcast %6 : i32 to vector<32x256xi32>
    %19 = arith.addi %8, %18 : vector<32x256xi32>
    %20 = arith.select %17, %19, %8 : vector<32x256xi1>, vector<32x256xi32>
    %c15_i32 = arith.constant 15 : i32
    %21 = vector.broadcast %c15_i32 : i32 to vector<32x256xi32>
    %22 = arith.cmpi slt, %20, %21 : vector<32x256xi32>
    %c1_i32_11 = arith.constant 1 : i32
    %23 = vector.broadcast %c1_i32_11 : i32 to vector<32x256xi32>
    %24 = arith.cmpi sge, %20, %23 : vector<32x256xi32>
    %cst = arith.constant 0.000000e+00 : f32
    %25 = vector.broadcast %cst : f32 to vector<32x256xf32>
    %26 = arith.maximumf %1, %25 : vector<32x256xf32>
    %cst_12 = arith.constant 0.000000e+00 : f32
    %27 = vector.broadcast %cst_12 : f32 to vector<32x17xf32>
    %28 = vector.extract_strided_slice %26 {offsets = [0, 0], sizes = [32, 239], strides = [1, 1]} : vector<32x256xf32> to vector<32x239xf32>
    %29 = tpu.concatenate %27, %28 in 1 : vector<32x17xf32>, vector<32x239xf32> -> vector<32x256xf32>
    %cst_13 = arith.constant 0.000000e+00 : f32
    %30 = vector.broadcast %cst_13 : f32 to vector<32x256xf32>
    %31 = arith.select %24, %29, %30 : vector<32x256xi1>, vector<32x256xf32>
    %cst_14 = arith.constant 0.000000e+00 : f32
    %32 = vector.broadcast %cst_14 : f32 to vector<32x16xf32>
    %33 = vector.extract_strided_slice %26 {offsets = [0, 0], sizes = [32, 240], strides = [1, 1]} : vector<32x256xf32> to vector<32x240xf32>
    %34 = tpu.concatenate %32, %33 in 1 : vector<32x16xf32>, vector<32x240xf32> -> vector<32x256xf32>
    %cst_15 = arith.constant 0.000000e+00 : f32
    %35 = vector.broadcast %cst_15 : f32 to vector<32x15xf32>
    %36 = vector.extract_strided_slice %26 {offsets = [0, 0], sizes = [32, 241], strides = [1, 1]} : vector<32x256xf32> to vector<32x241xf32>
    %37 = tpu.concatenate %35, %36 in 1 : vector<32x15xf32>, vector<32x241xf32> -> vector<32x256xf32>
    %cst_16 = arith.constant 0.000000e+00 : f32
    %38 = vector.broadcast %cst_16 : f32 to vector<32x256xf32>
    %39 = arith.select %22, %37, %38 : vector<32x256xi1>, vector<32x256xf32>
    %cst_17 = arith.constant 0.000000e+00 : f32
    %40 = vector.broadcast %cst_17 : f32 to vector<32x1xf32>
    %41 = vector.extract_strided_slice %26 {offsets = [0, 0], sizes = [32, 255], strides = [1, 1]} : vector<32x256xf32> to vector<32x255xf32>
    %42 = tpu.concatenate %40, %41 in 1 : vector<32x1xf32>, vector<32x255xf32> -> vector<32x256xf32>
    %cst_18 = arith.constant 0.000000e+00 : f32
    %43 = vector.broadcast %cst_18 : f32 to vector<32x256xf32>
    %44 = arith.select %24, %42, %43 : vector<32x256xi1>, vector<32x256xf32>
    %cst_19 = arith.constant 0.000000e+00 : f32
    %45 = vector.broadcast %cst_19 : f32 to vector<32x1xf32>
    %46 = vector.extract_strided_slice %26 {offsets = [0, 1], sizes = [32, 255], strides = [1, 1]} : vector<32x256xf32> to vector<32x255xf32>
    %47 = tpu.concatenate %46, %45 in 1 : vector<32x255xf32>, vector<32x1xf32> -> vector<32x256xf32>
    %cst_20 = arith.constant 0.000000e+00 : f32
    %48 = vector.broadcast %cst_20 : f32 to vector<32x256xf32>
    %49 = arith.select %22, %47, %48 : vector<32x256xi1>, vector<32x256xf32>
    %cst_21 = arith.constant 0.000000e+00 : f32
    %50 = vector.broadcast %cst_21 : f32 to vector<32x15xf32>
    %51 = vector.extract_strided_slice %26 {offsets = [0, 15], sizes = [32, 241], strides = [1, 1]} : vector<32x256xf32> to vector<32x241xf32>
    %52 = tpu.concatenate %51, %50 in 1 : vector<32x241xf32>, vector<32x15xf32> -> vector<32x256xf32>
    %cst_22 = arith.constant 0.000000e+00 : f32
    %53 = vector.broadcast %cst_22 : f32 to vector<32x256xf32>
    %54 = arith.select %24, %52, %53 : vector<32x256xi1>, vector<32x256xf32>
    %cst_23 = arith.constant 0.000000e+00 : f32
    %55 = vector.broadcast %cst_23 : f32 to vector<32x16xf32>
    %56 = vector.extract_strided_slice %26 {offsets = [0, 16], sizes = [32, 240], strides = [1, 1]} : vector<32x256xf32> to vector<32x240xf32>
    %57 = tpu.concatenate %56, %55 in 1 : vector<32x240xf32>, vector<32x16xf32> -> vector<32x256xf32>
    %cst_24 = arith.constant 0.000000e+00 : f32
    %58 = vector.broadcast %cst_24 : f32 to vector<32x17xf32>
    %59 = vector.extract_strided_slice %26 {offsets = [0, 17], sizes = [32, 239], strides = [1, 1]} : vector<32x256xf32> to vector<32x239xf32>
    %60 = tpu.concatenate %59, %58 in 1 : vector<32x239xf32>, vector<32x17xf32> -> vector<32x256xf32>
    %cst_25 = arith.constant 0.000000e+00 : f32
    %61 = vector.broadcast %cst_25 : f32 to vector<32x256xf32>
    %62 = arith.select %22, %60, %61 : vector<32x256xi1>, vector<32x256xf32>
    %63 = tpu.concatenate %31, %34, %39, %44, %26, %49, %54, %57, %62 in 0 : vector<32x256xf32>, vector<32x256xf32>, vector<32x256xf32>, vector<32x256xf32>, vector<32x256xf32>, vector<32x256xf32>, vector<32x256xf32>, vector<32x256xf32>, vector<32x256xf32> -> vector<288x256xf32>
    %64 = vector.extract_strided_slice %2 {offsets = [0, 0, 0], sizes = [1, 8, 288], strides = [1, 1, 1]} : vector<2x8x288xf32> to vector<1x8x288xf32>
    %65 = vector.shape_cast %64 : vector<1x8x288xf32> to vector<8x288xf32>
    %cst_26 = arith.constant dense<0.000000e+00> : vector<8x256xf32>
    %66 = tpu.matmul %65, %63, %cst_26 {dimension_numbers = #tpu.dot_dimension_numbers<[1], [0], [0], [1], [0, 0, 1, 1], [], []>} : vector<8x288xf32>, vector<288x256xf32>, vector<8x256xf32> -> vector<8x256xf32>
    %cst_27 = arith.constant 0.000000e+00 : f32
    %67 = vector.broadcast %cst_27 : f32 to vector<8x256xf32>
    %68 = arith.maximumf %66, %67 : vector<8x256xf32>
    %69 = vector.extract_strided_slice %3 {offsets = [0, 0, 0], sizes = [1, 32, 8], strides = [1, 1, 1]} : vector<2x32x8xf32> to vector<1x32x8xf32>
    %70 = vector.shape_cast %69 : vector<1x32x8xf32> to vector<32x8xf32>
    %cst_28 = arith.constant dense<0.000000e+00> : vector<32x256xf32>
    %71 = tpu.matmul %70, %68, %cst_28 {dimension_numbers = #tpu.dot_dimension_numbers<[1], [0], [0], [1], [0, 0, 1, 1], [], []>} : vector<32x8xf32>, vector<8x256xf32>, vector<32x256xf32> -> vector<32x256xf32>
    %72 = arith.addf %1, %71 : vector<32x256xf32>
    %cst_29 = arith.constant 0.000000e+00 : f32
    %73 = vector.broadcast %cst_29 : f32 to vector<32x256xf32>
    %74 = arith.maximumf %72, %73 : vector<32x256xf32>
    %cst_30 = arith.constant 0.000000e+00 : f32
    %75 = vector.broadcast %cst_30 : f32 to vector<32x17xf32>
    %76 = vector.extract_strided_slice %74 {offsets = [0, 0], sizes = [32, 239], strides = [1, 1]} : vector<32x256xf32> to vector<32x239xf32>
    %77 = tpu.concatenate %75, %76 in 1 : vector<32x17xf32>, vector<32x239xf32> -> vector<32x256xf32>
    %cst_31 = arith.constant 0.000000e+00 : f32
    %78 = vector.broadcast %cst_31 : f32 to vector<32x256xf32>
    %79 = arith.select %24, %77, %78 : vector<32x256xi1>, vector<32x256xf32>
    %cst_32 = arith.constant 0.000000e+00 : f32
    %80 = vector.broadcast %cst_32 : f32 to vector<32x16xf32>
    %81 = vector.extract_strided_slice %74 {offsets = [0, 0], sizes = [32, 240], strides = [1, 1]} : vector<32x256xf32> to vector<32x240xf32>
    %82 = tpu.concatenate %80, %81 in 1 : vector<32x16xf32>, vector<32x240xf32> -> vector<32x256xf32>
    %cst_33 = arith.constant 0.000000e+00 : f32
    %83 = vector.broadcast %cst_33 : f32 to vector<32x15xf32>
    %84 = vector.extract_strided_slice %74 {offsets = [0, 0], sizes = [32, 241], strides = [1, 1]} : vector<32x256xf32> to vector<32x241xf32>
    %85 = tpu.concatenate %83, %84 in 1 : vector<32x15xf32>, vector<32x241xf32> -> vector<32x256xf32>
    %cst_34 = arith.constant 0.000000e+00 : f32
    %86 = vector.broadcast %cst_34 : f32 to vector<32x256xf32>
    %87 = arith.select %22, %85, %86 : vector<32x256xi1>, vector<32x256xf32>
    %cst_35 = arith.constant 0.000000e+00 : f32
    %88 = vector.broadcast %cst_35 : f32 to vector<32x1xf32>
    %89 = vector.extract_strided_slice %74 {offsets = [0, 0], sizes = [32, 255], strides = [1, 1]} : vector<32x256xf32> to vector<32x255xf32>
    %90 = tpu.concatenate %88, %89 in 1 : vector<32x1xf32>, vector<32x255xf32> -> vector<32x256xf32>
    %cst_36 = arith.constant 0.000000e+00 : f32
    %91 = vector.broadcast %cst_36 : f32 to vector<32x256xf32>
    %92 = arith.select %24, %90, %91 : vector<32x256xi1>, vector<32x256xf32>
    %cst_37 = arith.constant 0.000000e+00 : f32
    %93 = vector.broadcast %cst_37 : f32 to vector<32x1xf32>
    %94 = vector.extract_strided_slice %74 {offsets = [0, 1], sizes = [32, 255], strides = [1, 1]} : vector<32x256xf32> to vector<32x255xf32>
    %95 = tpu.concatenate %94, %93 in 1 : vector<32x255xf32>, vector<32x1xf32> -> vector<32x256xf32>
    %cst_38 = arith.constant 0.000000e+00 : f32
    %96 = vector.broadcast %cst_38 : f32 to vector<32x256xf32>
    %97 = arith.select %22, %95, %96 : vector<32x256xi1>, vector<32x256xf32>
    %cst_39 = arith.constant 0.000000e+00 : f32
    %98 = vector.broadcast %cst_39 : f32 to vector<32x15xf32>
    %99 = vector.extract_strided_slice %74 {offsets = [0, 15], sizes = [32, 241], strides = [1, 1]} : vector<32x256xf32> to vector<32x241xf32>
    %100 = tpu.concatenate %99, %98 in 1 : vector<32x241xf32>, vector<32x15xf32> -> vector<32x256xf32>
    %cst_40 = arith.constant 0.000000e+00 : f32
    %101 = vector.broadcast %cst_40 : f32 to vector<32x256xf32>
    %102 = arith.select %24, %100, %101 : vector<32x256xi1>, vector<32x256xf32>
    %cst_41 = arith.constant 0.000000e+00 : f32
    %103 = vector.broadcast %cst_41 : f32 to vector<32x16xf32>
    %104 = vector.extract_strided_slice %74 {offsets = [0, 16], sizes = [32, 240], strides = [1, 1]} : vector<32x256xf32> to vector<32x240xf32>
    %105 = tpu.concatenate %104, %103 in 1 : vector<32x240xf32>, vector<32x16xf32> -> vector<32x256xf32>
    %cst_42 = arith.constant 0.000000e+00 : f32
    %106 = vector.broadcast %cst_42 : f32 to vector<32x17xf32>
    %107 = vector.extract_strided_slice %74 {offsets = [0, 17], sizes = [32, 239], strides = [1, 1]} : vector<32x256xf32> to vector<32x239xf32>
    %108 = tpu.concatenate %107, %106 in 1 : vector<32x239xf32>, vector<32x17xf32> -> vector<32x256xf32>
    %cst_43 = arith.constant 0.000000e+00 : f32
    %109 = vector.broadcast %cst_43 : f32 to vector<32x256xf32>
    %110 = arith.select %22, %108, %109 : vector<32x256xi1>, vector<32x256xf32>
    %111 = tpu.concatenate %79, %82, %87, %92, %74, %97, %102, %105, %110 in 0 : vector<32x256xf32>, vector<32x256xf32>, vector<32x256xf32>, vector<32x256xf32>, vector<32x256xf32>, vector<32x256xf32>, vector<32x256xf32>, vector<32x256xf32>, vector<32x256xf32> -> vector<288x256xf32>
    %112 = vector.extract_strided_slice %2 {offsets = [1, 0, 0], sizes = [1, 8, 288], strides = [1, 1, 1]} : vector<2x8x288xf32> to vector<1x8x288xf32>
    %113 = vector.shape_cast %112 : vector<1x8x288xf32> to vector<8x288xf32>
    %cst_44 = arith.constant dense<0.000000e+00> : vector<8x256xf32>
    %114 = tpu.matmul %113, %111, %cst_44 {dimension_numbers = #tpu.dot_dimension_numbers<[1], [0], [0], [1], [0, 0, 1, 1], [], []>} : vector<8x288xf32>, vector<288x256xf32>, vector<8x256xf32> -> vector<8x256xf32>
    %cst_45 = arith.constant 0.000000e+00 : f32
    %115 = vector.broadcast %cst_45 : f32 to vector<8x256xf32>
    %116 = arith.maximumf %114, %115 : vector<8x256xf32>
    %117 = vector.extract_strided_slice %3 {offsets = [1, 0, 0], sizes = [1, 32, 8], strides = [1, 1, 1]} : vector<2x32x8xf32> to vector<1x32x8xf32>
    %118 = vector.shape_cast %117 : vector<1x32x8xf32> to vector<32x8xf32>
    %cst_46 = arith.constant dense<0.000000e+00> : vector<32x256xf32>
    %119 = tpu.matmul %118, %116, %cst_46 {dimension_numbers = #tpu.dot_dimension_numbers<[1], [0], [0], [1], [0, 0, 1, 1], [], []>} : vector<32x8xf32>, vector<8x256xf32>, vector<32x256xf32> -> vector<32x256xf32>
    %120 = arith.addf %72, %119 : vector<32x256xf32>
    %cst_47 = arith.constant 0.000000e+00 : f32
    %121 = vector.broadcast %cst_47 : f32 to vector<32x256xf32>
    %122 = arith.maximumf %120, %121 : vector<32x256xf32>
    %c0_48 = arith.constant 0 : index
    %c0_49 = arith.constant 0 : index
    %c0_50 = arith.constant 0 : index
    %123 = vector.load %arg4[%c0_48, %c0_49, %c0_50] : memref<1x32x256xf32, #tpu.memory_space<vmem>>, vector<1x32x256xf32>
    %124 = vector.shape_cast %123 : vector<1x32x256xf32> to vector<32x256xf32>
    %125 = vector.shape_cast %122 : vector<32x256xf32> to vector<1x32x256xf32>
    tpu.vector_store %arg4[%c0_48, %c0_49, %c0_50], %125 {strides = array<i32>} : memref<1x32x256xf32, #tpu.memory_space<vmem>>, vector<1x32x256xf32>,
    return
  }
  func.func @transform_0(%arg0: i32) -> (i32, i32, i32) {
    %c0_i32 = arith.constant 0 : i32
    %c0_i32_0 = arith.constant 0 : i32
    %c0_i32_1 = arith.constant 0 : i32
    return %arg0, %c0_i32, %c0_i32_0 : i32, i32, i32
  }
  func.func @transform_1(%arg0: i32) -> (i32, i32, i32) {
    %c0_i32 = arith.constant 0 : i32
    %c0_i32_0 = arith.constant 0 : i32
    %c0_i32_1 = arith.constant 0 : i32
    %c0_i32_2 = arith.constant 0 : i32
    return %c0_i32, %c0_i32_0, %c0_i32_1 : i32, i32, i32
  }
  func.func @transform_2(%arg0: i32) -> (i32, i32, i32) {
    %c0_i32 = arith.constant 0 : i32
    %c0_i32_0 = arith.constant 0 : i32
    %c0_i32_1 = arith.constant 0 : i32
    %c0_i32_2 = arith.constant 0 : i32
    return %c0_i32, %c0_i32_0, %c0_i32_1 : i32, i32, i32
  }
  func.func @transform_3(%arg0: i32) -> (i32, i32, i32) {
    %c0_i32 = arith.constant 0 : i32
    %c0_i32_0 = arith.constant 0 : i32
    %c0_i32_1 = arith.constant 0 : i32
    return %arg0, %c0_i32, %c0_i32_0 : i32, i32, i32
  }
}

</mosaic_0001>

<llo_original>
// kernel: residual_stack_forward.1
$region0: #{residual_stack_forward.1}
  #allocation0 [shape = 'u32[]', space=smem, size = 0x4, offset = 0x4, fixed_abs, tag = 'smem constant byte address 0x4 - core index']
  #allocation1 [shape = 'u32[72,128]{1,0:T(1,128)}', space=vmem, size = 0x9000, scoped, tag = 'internal scratch']
  %s0 = inlined_call_operand.vmem [shape: f32[2,32,256], index: 0, kind: input, shape index: {}]
  %s1 = inlined_call_operand.vmem [shape: f32[2,8,288], index: 1, kind: input, shape index: {}]
  %s2 = inlined_call_operand.vmem [shape: f32[2,32,8], index: 2, kind: input, shape index: {}]
  %s3 = inlined_call_operand.vmem [shape: f32[2,32,256], index: 3, kind: output, shape index: {}]
  %s4 = sld [smem:[#allocation0]]
  $region45: #{residual_stack_forward.1} parent=0
    _
  %s6 = ssub.s32 1, %s4
  %s7 = scalar_select 0, %s6, %s4
  loop: start=0, step=1, limit=4
  $region2: #{residual_stack_forward.1} parent=0 // loop_pre_header
    _
  $region3: #{residual_stack_forward.1} parent=0 // loop_header
    %s9 = sphi 0, %s13
    %p10 = scmp.ge.s32.totalorder %s9, 4
    %s19 = sphi 0, %s21
    %s22 = sphi 0, %s19
    %s23 = sphi 0, %s22
    %s39 = sphi 0, %s23
    %s43 = sphi 0, %s43
    %s45 = sphi 0, %s43
    %s46 = sphi 0, %s45
    %s60 = sphi 0, %s46
    %s64 = sphi 0, %s64
    %s66 = sphi 0, %s64
    %s67 = sphi 0, %s66
    %s81 = sphi 0, %s67
    %s87 = sphi 0, %s89
    %s90 = sphi 0, %s87
    %s91 = sphi 0, %s90
    %s107 = sphi 0, %s91
  $region4: #{residual_stack_forward.1} parent=0 // loop_header_branch
    %12 = sbr.rel (%p10) target = $region8
  $region5: #{residual_stack_forward.1} parent=0 // loop_body
    %s14 = ssub.s32 %s9, 1
    %s15 = ssub.s32 %s9, 2
    %s16 = sadd.s32 %s9, 1
    %s17 = ssub.s32 %s9, %s16
    %p18 = scmp.eq.s32.totalorder %s17, 0
    %s20 = sadd.s32 %s19, 1
    %s21 = scalar_select %p18, %s19, %s20
    %p24 = pneg %p18
    %p25 = scmp.eq.s32.totalorder %s9, 1
    %p26 = por %p24, %p25
    %p27 = scmp.ne.s32.totalorder %s19, %s22
    %p28 = scmp.eq.s32.totalorder %s9, 0
    %p29 = por %p27, %p28
    %p30 = scmp.ne.s32.totalorder %s19, %s22
    %p31 = scmp.eq.s32.totalorder %s14, 1
    %p32 = por %p30, %p31
    %p33 = scmp.ne.s32.totalorder %s22, %s23
    %p34 = scmp.eq.s32.totalorder %s14, 0
    %p35 = por %p33, %p34
    %p36 = scmp.ne.s32.totalorder %s22, %s23
    %p37 = scmp.eq.s32.totalorder %s15, 1
    %p38 = por %p36, %p37
    %p40 = scmp.ne.s32.totalorder %s23, %s39
    %p41 = scmp.eq.s32.totalorder %s15, 0
    %p42 = por %p40, %p41
    %s44 = sadd.s32 %s43, 1
    %p47 = scmp.eq.s32.totalorder %s9, 1
    %p48 = scmp.ne.s32.totalorder %s43, %s45
    %p49 = scmp.eq.s32.totalorder %s9, 0
    %p50 = por %p48, %p49
    %p51 = scmp.ne.s32.totalorder %s43, %s45
    %p52 = scmp.eq.s32.totalorder %s14, 1
    %p53 = por %p51, %p52
    %p54 = scmp.ne.s32.totalorder %s45, %s46
    %p55 = scmp.eq.s32.totalorder %s14, 0
    %p56 = por %p54, %p55
    %p57 = scmp.ne.s32.totalorder %s45, %s46
    %p58 = scmp.eq.s32.totalorder %s15, 1
    %p59 = por %p57, %p58
    %p61 = scmp.ne.s32.totalorder %s46, %s60
    %p62 = scmp.eq.s32.totalorder %s15, 0
    %p63 = por %p61, %p62
    %s65 = sadd.s32 %s64, 1
    %p68 = scmp.eq.s32.totalorder %s9, 1
    %p69 = scmp.ne.s32.totalorder %s64, %s66
    %p70 = scmp.eq.s32.totalorder %s9, 0
    %p71 = por %p69, %p70
    %p72 = scmp.ne.s32.totalorder %s64, %s66
    %p73 = scmp.eq.s32.totalorder %s14, 1
    %p74 = por %p72, %p73
    %p75 = scmp.ne.s32.totalorder %s66, %s67
    %p76 = scmp.eq.s32.totalorder %s14, 0
    %p77 = por %p75, %p76
    %p78 = scmp.ne.s32.totalorder %s66, %s67
    %p79 = scmp.eq.s32.totalorder %s15, 1
    %p80 = por %p78, %p79
    %p82 = scmp.ne.s32.totalorder %s67, %s81
    %p83 = scmp.eq.s32.totalorder %s15, 0
    %p84 = por %p82, %p83
    %s85 = ssub.s32 %s9, %s16
    %p86 = scmp.eq.s32.totalorder %s85, 0
    %s88 = sadd.s32 %s87, 1
    %s89 = scalar_select %p86, %s87, %s88
    %p92 = pneg %p86
    %p93 = scmp.eq.s32.totalorder %s9, 1
    %p94 = por %p92, %p93
    %p95 = scmp.ne.s32.totalorder %s87, %s90
    %p96 = scmp.eq.s32.totalorder %s9, 0
    %p97 = por %p95, %p96
    %p98 = scmp.ne.s32.totalorder %s87, %s90
    %p99 = scmp.eq.s32.totalorder %s14, 1
    %p100 = por %p98, %p99
    %p101 = scmp.ne.s32.totalorder %s90, %s91
    %p102 = scmp.eq.s32.totalorder %s14, 0
    %p103 = por %p101, %p102
    %p104 = scmp.ne.s32.totalorder %s90, %s91
    %p105 = scmp.eq.s32.totalorder %s15, 1
    %p106 = por %p104, %p105
    %p108 = scmp.ne.s32.totalorder %s91, %s107
    %p109 = scmp.eq.s32.totalorder %s15, 0
    %p110 = por %p108, %p109
    %p111 = scmp.le.s32.totalorder 1, %s9
    %p112 = scmp.lt.s32.totalorder %s9, 3
    %p113 = pnand %p111, %p112
    %p114 = pneg %p113
    // Predicated region
    $region9: #{residual_stack_forward.1} parent=5 // pred_check
      _
    $region10: #{residual_stack_forward.1} parent=5 // pred_check_branch
      %116 = sbr.rel (%p113) target = $region12
    $region11: #{residual_stack_forward.1} parent=5 // pred_region
      %s117 = ssub.s32 %s9, 1
      // Predicated region
      $region13: #{residual_stack_forward.1} parent=11 // pred_check
        %p118 = pneg %p56
      $region14: #{residual_stack_forward.1} parent=11 // pred_check_branch
        %120 = sbr.rel (%p118) target = $region16
      $region15: #{residual_stack_forward.1} parent=11 // pred_region
        _
      $region16: #{residual_stack_forward.1} parent=11 // pred_fallthru
        _
      // Predicated region
      $region17: #{residual_stack_forward.1} parent=11 // pred_check
        %p121 = pneg %p77
      $region18: #{residual_stack_forward.1} parent=11 // pred_check_branch
        %123 = sbr.rel (%p121) target = $region20
      $region19: #{residual_stack_forward.1} parent=11 // pred_region
        _
      $region20: #{residual_stack_forward.1} parent=11 // pred_fallthru
        _
    $region12: #{residual_stack_forward.1} parent=5 // pred_fallthru
      _
    %p124 = scmp.lt.s32.totalorder %s9, 2
    // Predicated region
    $region21: #{residual_stack_forward.1} parent=5 // pred_check
      %p125 = pneg %p124
    $region22: #{residual_stack_forward.1} parent=5 // pred_check_branch
      %127 = sbr.rel (%p125) target = $region24
    $region23: #{residual_stack_forward.1} parent=5 // pred_region
      // Predicated region
      $region25: #{residual_stack_forward.1} parent=23 // pred_check
        %p128 = pneg %p29
      $region26: #{residual_stack_forward.1} parent=23 // pred_check_branch
        %130 = sbr.rel (%p128) target = $region28
      $region27: #{residual_stack_forward.1} parent=23 // pred_region
        %p131 = scmp.lt.s32.totalorder %s9, 1
        %s132 = scalar_select %p131, %s9, 1
        %s133 = smul.addr %s132, 8
        %s134 = smul.addr %s133, 8
        %s135 = scalar_lea.vmem %s0, %s134
      $region28: #{residual_stack_forward.1} parent=23 // pred_fallthru
        _
    $region24: #{residual_stack_forward.1} parent=5 // pred_fallthru
      _
    %p136 = scmp.le.s32.totalorder 1, %s9
    %p137 = scmp.lt.s32.totalorder %s9, 3
    %p138 = pnand %p136, %p137
    %p139 = pneg %p138
    // Predicated region
    $region29: #{residual_stack_forward.1} parent=5 // pred_check
      _
    $region30: #{residual_stack_forward.1} parent=5 // pred_check_branch
      %141 = sbr.rel (%p138) target = $region32
    $region31: #{residual_stack_forward.1} parent=5 // pred_region
      %s142 = ssub.s32 %s9, 1
      %p143 = scmp.lt.s32.totalorder %s14, 1
      %s144 = scalar_select %p143, %s14, 1
      %s145 = smul.addr %s144, 8
      %s146 = smul.addr %s145, 8
      %s147 = scalar_lea.vmem %s0, %s146
      %p148 = pneg %p35
      %p149 = pneg %p32
      %p150 = pneg %p56
      %p151 = pneg %p53
      %p152 = pneg %p77
      %p153 = pneg %p74
      %p154 = pneg %p103
      %p155 = pneg %p100
      %p156 = scmp.lt.s32.totalorder %s14, 1
      %s157 = scalar_select %p156, %s14, 1
      %s158 = smul.addr %s157, 8
      %s159 = smul.addr %s158, 8
      %s160 = scalar_lea.vmem %s3, %s159
      %p161 = scmp.lt.s32.totalorder %s14, 1
      %s162 = scalar_select %p161, %s14, 1
      %s163 = smul.addr %s162, 8
      %s164 = smul.addr %s163, 8
      %s165 = scalar_lea.vmem %s0, %s164
      %p166 = scmp.lt.s32.totalorder %s14, 1
      %s167 = scalar_select %p166, %s14, 1
      %s168 = smul.addr %s167, 8
      %s169 = smul.addr %s168, 8
      %s170 = scalar_lea.vmem %s3, %s169
      %v171 = vld [vmem:[%s165] sm:$0xff]
      %v172 = vld [vmem:[%s165 + $0x8] sm:$0xff]
      %v173 = vld [vmem:[%s165 + $0x10] sm:$0xff]
      %v174 = vld [vmem:[%s165 + $0x18] sm:$0xff]
      %v175 = vld [vmem:[%s165 + $0x20] sm:$0xff]
      %v176 = vld [vmem:[%s165 + $0x28] sm:$0xff]
      %v177 = vld [vmem:[%s165 + $0x30] sm:$0xff]
      %v178 = vld [vmem:[%s165 + $0x38] sm:$0xff]
      %v179 = vld [vmem:[%s1] sm:$0xff]
      %v180 = vld [vmem:[%s1 + $0x8] sm:$0xff]
      %v181 = vld [vmem:[%s1 + $0x10] sm:$0xff]
      %v182 = vld [vmem:[%s1 + $0x18] sm:$0xff]
      %v183 = vld [vmem:[%s1 + $0x20] sm:$0xff]
      %v184 = vld [vmem:[%s1 + $0x28] sm:$0xff]
      %v185 = vld [vmem:[%s2] sm:$0xff]
      %v186 = vld [vmem:[%s2 + $0x8] sm:$0xff]
      %v187 = vld [vmem:[%s2 + $0x10] sm:$0xff]
      %v188 = vld [vmem:[%s2 + $0x18] sm:$0xff]
      %v189 = vld [vmem:[%s2 + $0x20] sm:$0xff]
      %v190 = vld [vmem:[%s2 + $0x28] sm:$0xff]
      %v191 = vld [vmem:[%s2 + $0x30] sm:$0xff]
      %v192 = vld [vmem:[%s2 + $0x38] sm:$0xff]
      %v193 = vlaneseq
      %v194 = vand.u32 %v193, 127
      %v195 = vadd.s32 %v194, 128
      %vm196 = vcmp.lt.s32.totalorder %v194, 0
      %v197 = vsub.s32 0, %v194
      %v198 = vsel %vm196, %v197, %v194
      %v199 = vshrl.u32 %v198, 4
      %v200 = vand.u32 %v198, 15
      %v201 = vsub.s32 0, %v200
      %v202 = vsel %vm196, %v201, %v200
      %vm203 = vcmp.lt.s32.totalorder %v195, 0
      %v204 = vsub.s32 0, %v195
      %v205 = vsel %vm203, %v204, %v195
      %v206 = vshrl.u32 %v205, 4
      %v207 = vand.u32 %v205, 15
      %v208 = vsub.s32 0, %v207
      %v209 = vsel %vm203, %v208, %v207
      %vm210 = vcmp.ne.s32.totalorder %v202, 0
      %vm211 = vcmp.ne.s32.totalorder %v209, 0
      %vm212 = vcmp.lt.s32.totalorder %v202, 0
      %vm213 = vcmp.lt.s32.totalorder %v209, 0
      %vm214 = vmand %vm212, %vm210
      %vm215 = vmand %vm213, %vm211
      %v216 = vadd.s32 %v202, 16
      %v217 = vadd.s32 %v209, 16
      %v218 = vsel %vm214, %v216, %v202
      %v219 = vsel %vm215, %v217, %v209
      %vm220 = vcmp.lt.s32.totalorder %v218, 15
      %vm221 = vcmp.lt.s32.totalorder %v219, 15
      %vm222 = vcmp.ge.s32.totalorder %v218, 1
      %vm223 = vcmp.ge.s32.totalorder %v219, 1
      %v224 = vmax.f32 %v171, 0.0
      %v225 = vmax.f32 %v172, 0.0
      %v226 = vmax.f32 %v173, 0.0
      %v227 = vmax.f32 %v174, 0.0
      %v228 = vmax.f32 %v175, 0.0
      %v229 = vmax.f32 %v176, 0.0
      %v230 = vmax.f32 %v177, 0.0
      %v231 = vmax.f32 %v178, 0.0
      %240 = vrot.lane.b32.xlu0 %v224, 17
      %v241 = vpop.permute.xlu0 %240
      %242 = vrot.lane.b32.xlu0 %v225, 17
      %v243 = vpop.permute.xlu0 %242
      %244 = vrot.lane.b32.xlu0 %v226, 17
      %v245 = vpop.permute.xlu0 %244
      %246 = vrot.lane.b32.xlu0 %v227, 17
      %v247 = vpop.permute.xlu0 %246
      %248 = vrot.lane.b32.xlu0 %v228, 17
      %v249 = vpop.permute.xlu0 %248
      %250 = vrot.lane.b32.xlu0 %v229, 17
      %v251 = vpop.permute.xlu0 %250
      %252 = vrot.lane.b32.xlu0 %v230, 17
      %v253 = vpop.permute.xlu0 %252
      %254 = vrot.lane.b32.xlu0 %v231, 17
      %v255 = vpop.permute.xlu0 %254
      %vm256 = vcmask 138240
      %v257 = vsel %vm256, %v241, %v243
      %v258 = vsel %vm256, %v245, %v247
      %v259 = vsel %vm256, %v249, %v251
      %v260 = vsel %vm256, %v253, %v255
      %v269 = vsel %vm256, 0.0, %v241
      %v270 = vsel %vm256, 0.0, %v245
      %v271 = vsel %vm256, 0.0, %v249
      %v272 = vsel %vm256, 0.0, %v253
      %v273 = vsel %vm222, %v269, 0.0
      %v274 = vsel %vm223, %v257, 0.0
      %v275 = vsel %vm222, %v270, 0.0
      %v276 = vsel %vm223, %v258, 0.0
      %v277 = vsel %vm222, %v271, 0.0
      %v278 = vsel %vm223, %v259, 0.0
      %v279 = vsel %vm222, %v272, 0.0
      %v280 = vsel %vm223, %v260, 0.0
      %281 = vrot.lane.b32.xlu0 %v224, 16
      %v282 = vpop.permute.xlu0 %281
      %283 = vrot.lane.b32.xlu0 %v225, 16
      %v284 = vpop.permute.xlu0 %283
      %285 = vrot.lane.b32.xlu0 %v226, 16
      %v286 = vpop.permute.xlu0 %285
      %287 = vrot.lane.b32.xlu0 %v227, 16
      %v288 = vpop.permute.xlu0 %287
      %289 = vrot.lane.b32.xlu0 %v228, 16
      %v290 = vpop.permute.xlu0 %289
      %291 = vrot.lane.b32.xlu0 %v229, 16
      %v292 = vpop.permute.xlu0 %291
      %293 = vrot.lane.b32.xlu0 %v230, 16
      %v294 = vpop.permute.xlu0 %293
      %295 = vrot.lane.b32.xlu0 %v231, 16
      %v296 = vpop.permute.xlu0 %295
      %vm297 = vcmask 130048
      %v298 = vsel %vm297, %v282, %v284
      %v299 = vsel %vm297, %v286, %v288
      %v300 = vsel %vm297, %v290, %v292
      %v301 = vsel %vm297, %v294, %v296
      %v310 = vsel %vm297, 0.0, %v282
      %v311 = vsel %vm297, 0.0, %v286
      %v312 = vsel %vm297, 0.0, %v290
      %v313 = vsel %vm297, 0.0, %v294
      %314 = vrot.lane.b32.xlu0 %v224, 15
      %v315 = vpop.permute.xlu0 %314
      %316 = vrot.lane.b32.xlu0 %v225, 15
      %v317 = vpop.permute.xlu0 %316
      %318 = vrot.lane.b32.xlu0 %v226, 15
      %v319 = vpop.permute.xlu0 %318
      %320 = vrot.lane.b32.xlu0 %v227, 15
      %v321 = vpop.permute.xlu0 %320
      %322 = vrot.lane.b32.xlu0 %v228, 15
      %v323 = vpop.permute.xlu0 %322
      %324 = vrot.lane.b32.xlu0 %v229, 15
      %v325 = vpop.permute.xlu0 %324
      %326 = vrot.lane.b32.xlu0 %v230, 15
      %v327 = vpop.permute.xlu0 %326
      %328 = vrot.lane.b32.xlu0 %v231, 15
      %v329 = vpop.permute.xlu0 %328
      %vm330 = vcmask 121856
      %v331 = vsel %vm330, %v315, %v317
      %v332 = vsel %vm330, %v319, %v321
      %v333 = vsel %vm330, %v323, %v325
      %v334 = vsel %vm330, %v327, %v329
      %v343 = vsel %vm330, 0.0, %v315
      %v344 = vsel %vm330, 0.0, %v319
      %v345 = vsel %vm330, 0.0, %v323
      %v346 = vsel %vm330, 0.0, %v327
      %v347 = vsel %vm220, %v343, 0.0
      %v348 = vsel %vm221, %v331, 0.0
      %v349 = vsel %vm220, %v344, 0.0
      %v350 = vsel %vm221, %v332, 0.0
      %v351 = vsel %vm220, %v345, 0.0
      %v352 = vsel %vm221, %v333, 0.0
      %v353 = vsel %vm220, %v346, 0.0
      %v354 = vsel %vm221, %v334, 0.0
      %355 = vrot.lane.b32.xlu0 %v224, 1
      %v356 = vpop.permute.xlu0 %355
      %357 = vrot.lane.b32.xlu0 %v225, 1
      %v358 = vpop.permute.xlu0 %357
      %359 = vrot.lane.b32.xlu0 %v226, 1
      %v360 = vpop.permute.xlu0 %359
      %361 = vrot.lane.b32.xlu0 %v227, 1
      %v362 = vpop.permute.xlu0 %361
      %363 = vrot.lane.b32.xlu0 %v228, 1
      %v364 = vpop.permute.xlu0 %363
      %365 = vrot.lane.b32.xlu0 %v229, 1
      %v366 = vpop.permute.xlu0 %365
      %367 = vrot.lane.b32.xlu0 %v230, 1
      %v368 = vpop.permute.xlu0 %367
      %369 = vrot.lane.b32.xlu0 %v231, 1
      %v370 = vpop.permute.xlu0 %369
      %vm371 = vcmask 7168
      %v372 = vsel %vm371, %v356, %v358
      %v373 = vsel %vm371, %v360, %v362
      %v374 = vsel %vm371, %v364, %v366
      %v375 = vsel %vm371, %v368, %v370
      %v384 = vsel %vm371, 0.0, %v356
      %v385 = vsel %vm371, 0.0, %v360
      %v386 = vsel %vm371, 0.0, %v364
      %v387 = vsel %vm371, 0.0, %v368
      %v388 = vsel %vm222, %v384, 0.0
      %v389 = vsel %vm223, %v372, 0.0
      %v390 = vsel %vm222, %v385, 0.0
      %v391 = vsel %vm223, %v373, 0.0
      %v392 = vsel %vm222, %v386, 0.0
      %v393 = vsel %vm223, %v374, 0.0
      %v394 = vsel %vm222, %v387, 0.0
      %v395 = vsel %vm223, %v375, 0.0
      %396 = vrot.lane.b32.xlu0 %v224, 127
      %v397 = vpop.permute.xlu0 %396
      %398 = vrot.lane.b32.xlu0 %v225, 127
      %v399 = vpop.permute.xlu0 %398
      %400 = vrot.lane.b32.xlu0 %v226, 127
      %v401 = vpop.permute.xlu0 %400
      %402 = vrot.lane.b32.xlu0 %v227, 127
      %v403 = vpop.permute.xlu0 %402
      %404 = vrot.lane.b32.xlu0 %v228, 127
      %v405 = vpop.permute.xlu0 %404
      %406 = vrot.lane.b32.xlu0 %v229, 127
      %v407 = vpop.permute.xlu0 %406
      %408 = vrot.lane.b32.xlu0 %v230, 127
      %v409 = vpop.permute.xlu0 %408
      %410 = vrot.lane.b32.xlu0 %v231, 127
      %v411 = vpop.permute.xlu0 %410
      %vm412 = vcmask 1039360
      %v413 = vsel %vm412, %v397, %v399
      %v414 = vsel %vm412, %v401, %v403
      %v415 = vsel %vm412, %v405, %v407
      %v416 = vsel %vm412, %v409, %v411
      %v425 = vsel %vm412, %v399, 0.0
      %v426 = vsel %vm412, %v403, 0.0
      %v427 = vsel %vm412, %v407, 0.0
      %v428 = vsel %vm412, %v411, 0.0
      %v429 = vsel %vm220, %v413, 0.0
      %v430 = vsel %vm221, %v425, 0.0
      %v431 = vsel %vm220, %v414, 0.0
      %v432 = vsel %vm221, %v426, 0.0
      %v433 = vsel %vm220, %v415, 0.0
      %v434 = vsel %vm221, %v427, 0.0
      %v435 = vsel %vm220, %v416, 0.0
      %v436 = vsel %vm221, %v428, 0.0
      %437 = vrot.lane.b32.xlu0 %v224, 113
      %v438 = vpop.permute.xlu0 %437
      %439 = vrot.lane.b32.xlu0 %v225, 113
      %v440 = vpop.permute.xlu0 %439
      %441 = vrot.lane.b32.xlu0 %v226, 113
      %v442 = vpop.permute.xlu0 %441
      %443 = vrot.lane.b32.xlu0 %v227, 113
      %v444 = vpop.permute.xlu0 %443
      %445 = vrot.lane.b32.xlu0 %v228, 113
      %v446 = vpop.permute.xlu0 %445
      %447 = vrot.lane.b32.xlu0 %v229, 113
      %v448 = vpop.permute.xlu0 %447
      %449 = vrot.lane.b32.xlu0 %v230, 113
      %v450 = vpop.permute.xlu0 %449
      %451 = vrot.lane.b32.xlu0 %v231, 113
      %v452 = vpop.permute.xlu0 %451
      %vm453 = vcmask 924672
      %v454 = vsel %vm453, %v438, %v440
      %v455 = vsel %vm453, %v442, %v444
      %v456 = vsel %vm453, %v446, %v448
      %v457 = vsel %vm453, %v450, %v452
      %v466 = vsel %vm453, %v440, 0.0
      %v467 = vsel %vm453, %v444, 0.0
      %v468 = vsel %vm453, %v448, 0.0
      %v469 = vsel %vm453, %v452, 0.0
      %v470 = vsel %vm222, %v454, 0.0
      %v471 = vsel %vm223, %v466, 0.0
      %v472 = vsel %vm222, %v455, 0.0
      %v473 = vsel %vm223, %v467, 0.0
      %v474 = vsel %vm222, %v456, 0.0
      %v475 = vsel %vm223, %v468, 0.0
      %v476 = vsel %vm222, %v457, 0.0
      %v477 = vsel %vm223, %v469, 0.0
      %478 = vrot.lane.b32.xlu0 %v224, 112
      %v479 = vpop.permute.xlu0 %478
      %480 = vrot.lane.b32.xlu0 %v225, 112
      %v481 = vpop.permute.xlu0 %480
      %482 = vrot.lane.b32.xlu0 %v226, 112
      %v483 = vpop.permute.xlu0 %482
      %484 = vrot.lane.b32.xlu0 %v227, 112
      %v485 = vpop.permute.xlu0 %484
      %486 = vrot.lane.b32.xlu0 %v228, 112
      %v487 = vpop.permute.xlu0 %486
      %488 = vrot.lane.b32.xlu0 %v229, 112
      %v489 = vpop.permute.xlu0 %488
      %490 = vrot.lane.b32.xlu0 %v230, 112
      %v491 = vpop.permute.xlu0 %490
      %492 = vrot.lane.b32.xlu0 %v231, 112
      %v493 = vpop.permute.xlu0 %492
      %vm494 = vcmask 916480
      %v495 = vsel %vm494, %v479, %v481
      %v496 = vsel %vm494, %v483, %v485
      %v497 = vsel %vm494, %v487, %v489
      %v498 = vsel %vm494, %v491, %v493
      %v507 = vsel %vm494, %v481, 0.0
      %v508 = vsel %vm494, %v485, 0.0
      %v509 = vsel %vm494, %v489, 0.0
      %v510 = vsel %vm494, %v493, 0.0
      %511 = vrot.lane.b32.xlu0 %v224, 111
      %v512 = vpop.permute.xlu0 %511
      %513 = vrot.lane.b32.xlu0 %v225, 111
      %v514 = vpop.permute.xlu0 %513
      %515 = vrot.lane.b32.xlu0 %v226, 111
      %v516 = vpop.permute.xlu0 %515
      %517 = vrot.lane.b32.xlu0 %v227, 111
      %v518 = vpop.permute.xlu0 %517
      %519 = vrot.lane.b32.xlu0 %v228, 111
      %v520 = vpop.permute.xlu0 %519
      %521 = vrot.lane.b32.xlu0 %v229, 111
      %v522 = vpop.permute.xlu0 %521
      %523 = vrot.lane.b32.xlu0 %v230, 111
      %v524 = vpop.permute.xlu0 %523
      %525 = vrot.lane.b32.xlu0 %v231, 111
      %v526 = vpop.permute.xlu0 %525
      %vm527 = vcmask 908288
      %v528 = vsel %vm527, %v512, %v514
      %v529 = vsel %vm527, %v516, %v518
      %v530 = vsel %vm527, %v520, %v522
      %v531 = vsel %vm527, %v524, %v526
      %v540 = vsel %vm527, %v514, 0.0
      %v541 = vsel %vm527, %v518, 0.0
      %v542 = vsel %vm527, %v522, 0.0
      %v543 = vsel %vm527, %v526, 0.0
      %v544 = vsel %vm220, %v528, 0.0
      %v545 = vsel %vm221, %v540, 0.0
      %v546 = vsel %vm220, %v529, 0.0
      %v547 = vsel %vm221, %v541, 0.0
      %v548 = vsel %vm220, %v530, 0.0
      %v549 = vsel %vm221, %v542, 0.0
      %v550 = vsel %vm220, %v531, 0.0
      %v551 = vsel %vm221, %v543, 0.0
      %vm552 = vcmask 261120
      %v554 = vsel %vm552, %v181, 0
      %556 = vmatpush.msra.mxu0 %v394
      %557 = vmatpush.msra.mxu0 %v392
      %558 = vmatpush.msra.mxu0 %v390
      %559 = vmatpush.msra.mxu0 %v388
      %560 = vmatpush.msra.mxu0 %v353
      %561 = vmatpush.msra.mxu0 %v351
      %562 = vmatpush.msra.mxu0 %v349
      %563 = vmatpush.msra.mxu0 %v347
      %564 = vmatpush.msra.mxu0 %v313
      %565 = vmatpush.msra.mxu0 %v312
      %566 = vmatpush.msra.mxu0 %v311
      %567 = vmatpush.msra.mxu0 %v310
      %568 = vmatpush.msra.mxu0 %v279
      %569 = vmatpush.msra.mxu0 %v277
      %570 = vmatpush.msra.mxu0 %v275
      %571 = vmatpush.msra.mxu0 %v273
      %572 = vmatmul.f32.gmra.mxu0 %v179
      %v573 = vpop.f32.mrf.mxu0
      %v574 = vadd.f32 0.0, %v573
      %575 = vdwg.mxu0
      %576 = vmatpush.msra.mxu0 %v498
      %577 = vmatpush.msra.mxu0 %v497
      %578 = vmatpush.msra.mxu0 %v496
      %579 = vmatpush.msra.mxu0 %v495
      %580 = vmatpush.msra.mxu0 %v476
      %581 = vmatpush.msra.mxu0 %v474
      %582 = vmatpush.msra.mxu0 %v472
      %583 = vmatpush.msra.mxu0 %v470
      %584 = vmatpush.msra.mxu0 %v435
      %585 = vmatpush.msra.mxu0 %v433
      %586 = vmatpush.msra.mxu0 %v431
      %587 = vmatpush.msra.mxu0 %v429
      %588 = vmatpush.msra.mxu0 %v230
      %589 = vmatpush.msra.mxu0 %v228
      %590 = vmatpush.msra.mxu0 %v226
      %591 = vmatpush.msra.mxu0 %v224
      %592 = vmatmul.f32.gmra.mxu0 %v180
      %v593 = vpop.f32.mrf.mxu0
      %v594 = vadd.f32 %v574, %v593
      %595 = vdwg.mxu0
      %596 = vmatpush.msra.mxu0 0.0
      %597 = vmatpush.msra.mxu0 0.0
      %598 = vmatpush.msra.mxu0 0.0
      %599 = vmatpush.msra.mxu0 0.0
      %600 = vmatpush.msra.mxu0 0.0
      %601 = vmatpush.msra.mxu0 0.0
      %602 = vmatpush.msra.mxu0 0.0
      %603 = vmatpush.msra.mxu0 0.0
      %604 = vmatpush.msra.mxu0 0.0
      %605 = vmatpush.msra.mxu0 0.0
      %606 = vmatpush.msra.mxu0 0.0
      %607 = vmatpush.msra.mxu0 0.0
      %608 = vmatpush.msra.mxu0 %v550
      %609 = vmatpush.msra.mxu0 %v548
      %610 = vmatpush.msra.mxu0 %v546
      %611 = vmatpush.msra.mxu0 %v544
      %612 = vmatmul.f32.gmra.mxu0 %v554
      %v613 = vpop.f32.mrf.mxu0
      %v614 = vadd.f32 %v594, %v613
      %615 = vdwg.mxu0
      %616 = vmatpush.msra.mxu0 %v395
      %617 = vmatpush.msra.mxu0 %v393
      %618 = vmatpush.msra.mxu0 %v391
      %619 = vmatpush.msra.mxu0 %v389
      %620 = vmatpush.msra.mxu0 %v354
      %621 = vmatpush.msra.mxu0 %v352
      %622 = vmatpush.msra.mxu0 %v350
      %623 = vmatpush.msra.mxu0 %v348
      %624 = vmatpush.msra.mxu0 %v301
      %625 = vmatpush.msra.mxu0 %v300
      %626 = vmatpush.msra.mxu0 %v299
      %627 = vmatpush.msra.mxu0 %v298
      %628 = vmatpush.msra.mxu0 %v280
      %629 = vmatpush.msra.mxu0 %v278
      %630 = vmatpush.msra.mxu0 %v276
      %631 = vmatpush.msra.mxu0 %v274
      %632 = vmatmul.f32.gmra.mxu0 %v179
      %v633 = vpop.f32.mrf.mxu0
      %v634 = vadd.f32 0.0, %v633
      %635 = vdwg.mxu0
      %636 = vmatpush.msra.mxu0 %v510
      %637 = vmatpush.msra.mxu0 %v509
      %638 = vmatpush.msra.mxu0 %v508
      %639 = vmatpush.msra.mxu0 %v507
      %640 = vmatpush.msra.mxu0 %v477
      %641 = vmatpush.msra.mxu0 %v475
      %642 = vmatpush.msra.mxu0 %v473
      %643 = vmatpush.msra.mxu0 %v471
      %644 = vmatpush.msra.mxu0 %v436
      %645 = vmatpush.msra.mxu0 %v434
      %646 = vmatpush.msra.mxu0 %v432
      %647 = vmatpush.msra.mxu0 %v430
      %648 = vmatpush.msra.mxu0 %v231
      %649 = vmatpush.msra.mxu0 %v229
      %650 = vmatpush.msra.mxu0 %v227
      %651 = vmatpush.msra.mxu0 %v225
      %652 = vmatmul.f32.gmra.mxu0 %v180
      %v653 = vpop.f32.mrf.mxu0
      %v654 = vadd.f32 %v634, %v653
      %655 = vdwg.mxu0
      %656 = vmatpush.msra.mxu0 0.0
      %657 = vmatpush.msra.mxu0 0.0
      %658 = vmatpush.msra.mxu0 0.0
      %659 = vmatpush.msra.mxu0 0.0
      %660 = vmatpush.msra.mxu0 0.0
      %661 = vmatpush.msra.mxu0 0.0
      %662 = vmatpush.msra.mxu0 0.0
      %663 = vmatpush.msra.mxu0 0.0
      %664 = vmatpush.msra.mxu0 0.0
      %665 = vmatpush.msra.mxu0 0.0
      %666 = vmatpush.msra.mxu0 0.0
      %667 = vmatpush.msra.mxu0 0.0
      %668 = vmatpush.msra.mxu0 %v551
      %669 = vmatpush.msra.mxu0 %v549
      %670 = vmatpush.msra.mxu0 %v547
      %671 = vmatpush.msra.mxu0 %v545
      %672 = vmatmul.f32.gmra.mxu0 %v554
      %v673 = vpop.f32.mrf.mxu0
      %v674 = vadd.f32 %v654, %v673
      %675 = vdwg.mxu0
      %v676 = vmax.f32 %v614, 0.0
      %v677 = vmax.f32 %v674, 0.0
      %vm678 = vcmask 64512
      %v680 = vsel %vm678, %v185, 0
      %v683 = vsel %vm678, %v186, 0
      %v686 = vsel %vm678, %v187, 0
      %v689 = vsel %vm678, %v188, 0
      %691 = vmatpush.msra.mxu0 0.0
      %692 = vmatpush.msra.mxu0 0.0
      %693 = vmatpush.msra.mxu0 0.0
      %694 = vmatpush.msra.mxu0 0.0
      %695 = vmatpush.msra.mxu0 0.0
      %696 = vmatpush.msra.mxu0 0.0
      %697 = vmatpush.msra.mxu0 0.0
      %698 = vmatpush.msra.mxu0 0.0
      %699 = vmatpush.msra.mxu0 0.0
      %700 = vmatpush.msra.mxu0 0.0
      %701 = vmatpush.msra.mxu0 0.0
      %702 = vmatpush.msra.mxu0 0.0
      %703 = vmatpush.msra.mxu0 0.0
      %704 = vmatpush.msra.mxu0 0.0
      %705 = vmatpush.msra.mxu0 0.0
      %706 = vmatpush.msra.mxu0 %v676
      %707 = vmatmul.f32.gmra.mxu0 %v680
      %v708 = vpop.f32.mrf.mxu0
      %v709 = vadd.f32 0.0, %v708
      %710 = vmatmul.f32.gmra.mxu0 %v683
      %v711 = vpop.f32.mrf.mxu0
      %v712 = vadd.f32 0.0, %v711
      %713 = vmatmul.f32.gmra.mxu0 %v686
      %v714 = vpop.f32.mrf.mxu0
      %v715 = vadd.f32 0.0, %v714
      %716 = vmatmul.f32.gmra.mxu0 %v689
      %v717 = vpop.f32.mrf.mxu0
      %v718 = vadd.f32 0.0, %v717
      %719 = vdwg.mxu0
      %720 = vmatpush.msra.mxu0 0.0
      %721 = vmatpush.msra.mxu0 0.0
      %722 = vmatpush.msra.mxu0 0.0
      %723 = vmatpush.msra.mxu0 0.0
      %724 = vmatpush.msra.mxu0 0.0
      %725 = vmatpush.msra.mxu0 0.0
      %726 = vmatpush.msra.mxu0 0.0
      %727 = vmatpush.msra.mxu0 0.0
      %728 = vmatpush.msra.mxu0 0.0
      %729 = vmatpush.msra.mxu0 0.0
      %730 = vmatpush.msra.mxu0 0.0
      %731 = vmatpush.msra.mxu0 0.0
      %732 = vmatpush.msra.mxu0 0.0
      %733 = vmatpush.msra.mxu0 0.0
      %734 = vmatpush.msra.mxu0 0.0
      %735 = vmatpush.msra.mxu0 %v677
      %736 = vmatmul.f32.gmra.mxu0 %v680
      %v737 = vpop.f32.mrf.mxu0
      %v738 = vadd.f32 0.0, %v737
      %739 = vmatmul.f32.gmra.mxu0 %v683
      %v740 = vpop.f32.mrf.mxu0
      %v741 = vadd.f32 0.0, %v740
      %742 = vmatmul.f32.gmra.mxu0 %v686
      %v743 = vpop.f32.mrf.mxu0
      %v744 = vadd.f32 0.0, %v743
      %745 = vmatmul.f32.gmra.mxu0 %v689
      %v746 = vpop.f32.mrf.mxu0
      %v747 = vadd.f32 0.0, %v746
      %748 = vdwg.mxu0
      %v749 = vadd.f32 %v171, %v709
      %v750 = vadd.f32 %v172, %v738
      %v751 = vadd.f32 %v173, %v712
      %v752 = vadd.f32 %v174, %v741
      %v753 = vadd.f32 %v175, %v715
      %v754 = vadd.f32 %v176, %v744
      %v755 = vadd.f32 %v177, %v718
      %v756 = vadd.f32 %v178, %v747
      %v757 = vmax.f32 %v749, 0.0
      %v758 = vmax.f32 %v750, 0.0
      %v759 = vmax.f32 %v751, 0.0
      %v760 = vmax.f32 %v752, 0.0
      %v761 = vmax.f32 %v753, 0.0
      %v762 = vmax.f32 %v754, 0.0
      %v763 = vmax.f32 %v755, 0.0
      %v764 = vmax.f32 %v756, 0.0
      %773 = vrot.lane.b32.xlu0 %v757, 17
      %v774 = vpop.permute.xlu0 %773
      %775 = vrot.lane.b32.xlu0 %v758, 17
      %v776 = vpop.permute.xlu0 %775
      %777 = vrot.lane.b32.xlu0 %v759, 17
      %v778 = vpop.permute.xlu0 %777
      %779 = vrot.lane.b32.xlu0 %v760, 17
      %v780 = vpop.permute.xlu0 %779
      %781 = vrot.lane.b32.xlu0 %v761, 17
      %v782 = vpop.permute.xlu0 %781
      %783 = vrot.lane.b32.xlu0 %v762, 17
      %v784 = vpop.permute.xlu0 %783
      %785 = vrot.lane.b32.xlu0 %v763, 17
      %v786 = vpop.permute.xlu0 %785
      %787 = vrot.lane.b32.xlu0 %v764, 17
      %v788 = vpop.permute.xlu0 %787
      %v789 = vsel %vm256, %v774, %v776
      %v790 = vsel %vm256, %v778, %v780
      %v791 = vsel %vm256, %v782, %v784
      %v792 = vsel %vm256, %v786, %v788
      %v801 = vsel %vm256, 0.0, %v774
      %v802 = vsel %vm256, 0.0, %v778
      %v803 = vsel %vm256, 0.0, %v782
      %v804 = vsel %vm256, 0.0, %v786
      %v805 = vsel %vm222, %v801, 0.0
      %v806 = vsel %vm223, %v789, 0.0
      %v807 = vsel %vm222, %v802, 0.0
      %v808 = vsel %vm223, %v790, 0.0
      %v809 = vsel %vm222, %v803, 0.0
      %v810 = vsel %vm223, %v791, 0.0
      %v811 = vsel %vm222, %v804, 0.0
      %v812 = vsel %vm223, %v792, 0.0
      %813 = vrot.lane.b32.xlu0 %v757, 16
      %v814 = vpop.permute.xlu0 %813
      %815 = vrot.lane.b32.xlu0 %v758, 16
      %v816 = vpop.permute.xlu0 %815
      %817 = vrot.lane.b32.xlu0 %v759, 16
      %v818 = vpop.permute.xlu0 %817
      %819 = vrot.lane.b32.xlu0 %v760, 16
      %v820 = vpop.permute.xlu0 %819
      %821 = vrot.lane.b32.xlu0 %v761, 16
      %v822 = vpop.permute.xlu0 %821
      %823 = vrot.lane.b32.xlu0 %v762, 16
      %v824 = vpop.permute.xlu0 %823
      %825 = vrot.lane.b32.xlu0 %v763, 16
      %v826 = vpop.permute.xlu0 %825
      %827 = vrot.lane.b32.xlu0 %v764, 16
      %v828 = vpop.permute.xlu0 %827
      %v829 = vsel %vm297, %v814, %v816
      %v830 = vsel %vm297, %v818, %v820
      %v831 = vsel %vm297, %v822, %v824
      %v832 = vsel %vm297, %v826, %v828
      %v841 = vsel %vm297, 0.0, %v814
      %v842 = vsel %vm297, 0.0, %v818
      %v843 = vsel %vm297, 0.0, %v822
      %v844 = vsel %vm297, 0.0, %v826
      %845 = vrot.lane.b32.xlu0 %v757, 15
      %v846 = vpop.permute.xlu0 %845
      %847 = vrot.lane.b32.xlu0 %v758, 15
      %v848 = vpop.permute.xlu0 %847
      %849 = vrot.lane.b32.xlu0 %v759, 15
      %v850 = vpop.permute.xlu0 %849
      %851 = vrot.lane.b32.xlu0 %v760, 15
      %v852 = vpop.permute.xlu0 %851
      %853 = vrot.lane.b32.xlu0 %v761, 15
      %v854 = vpop.permute.xlu0 %853
      %855 = vrot.lane.b32.xlu0 %v762, 15
      %v856 = vpop.permute.xlu0 %855
      %857 = vrot.lane.b32.xlu0 %v763, 15
      %v858 = vpop.permute.xlu0 %857
      %859 = vrot.lane.b32.xlu0 %v764, 15
      %v860 = vpop.permute.xlu0 %859
      %v861 = vsel %vm330, %v846, %v848
      %v862 = vsel %vm330, %v850, %v852
      %v863 = vsel %vm330, %v854, %v856
      %v864 = vsel %vm330, %v858, %v860
      %v873 = vsel %vm330, 0.0, %v846
      %v874 = vsel %vm330, 0.0, %v850
      %v875 = vsel %vm330, 0.0, %v854
      %v876 = vsel %vm330, 0.0, %v858
      %v877 = vsel %vm220, %v873, 0.0
      %v878 = vsel %vm221, %v861, 0.0
      %v879 = vsel %vm220, %v874, 0.0
      %v880 = vsel %vm221, %v862, 0.0
      %v881 = vsel %vm220, %v875, 0.0
      %v882 = vsel %vm221, %v863, 0.0
      %v883 = vsel %vm220, %v876, 0.0
      %v884 = vsel %vm221, %v864, 0.0
      %885 = vrot.lane.b32.xlu0 %v757, 1
      %v886 = vpop.permute.xlu0 %885
      %887 = vrot.lane.b32.xlu0 %v758, 1
      %v888 = vpop.permute.xlu0 %887
      %889 = vrot.lane.b32.xlu0 %v759, 1
      %v890 = vpop.permute.xlu0 %889
      %891 = vrot.lane.b32.xlu0 %v760, 1
      %v892 = vpop.permute.xlu0 %891
      %893 = vrot.lane.b32.xlu0 %v761, 1
      %v894 = vpop.permute.xlu0 %893
      %895 = vrot.lane.b32.xlu0 %v762, 1
      %v896 = vpop.permute.xlu0 %895
      %897 = vrot.lane.b32.xlu0 %v763, 1
      %v898 = vpop.permute.xlu0 %897
      %899 = vrot.lane.b32.xlu0 %v764, 1
      %v900 = vpop.permute.xlu0 %899
      %v901 = vsel %vm371, %v886, %v888
      %v902 = vsel %vm371, %v890, %v892
      %v903 = vsel %vm371, %v894, %v896
      %v904 = vsel %vm371, %v898, %v900
      %v913 = vsel %vm371, 0.0, %v886
      %v914 = vsel %vm371, 0.0, %v890
      %v915 = vsel %vm371, 0.0, %v894
      %v916 = vsel %vm371, 0.0, %v898
      %v917 = vsel %vm222, %v913, 0.0
      %v918 = vsel %vm223, %v901, 0.0
      %v919 = vsel %vm222, %v914, 0.0
      %v920 = vsel %vm223, %v902, 0.0
      %v921 = vsel %vm222, %v915, 0.0
      %v922 = vsel %vm223, %v903, 0.0
      %v923 = vsel %vm222, %v916, 0.0
      %v924 = vsel %vm223, %v904, 0.0
      %925 = vrot.lane.b32.xlu0 %v757, 127
      %v926 = vpop.permute.xlu0 %925
      %927 = vrot.lane.b32.xlu0 %v758, 127
      %v928 = vpop.permute.xlu0 %927
      %929 = vrot.lane.b32.xlu0 %v759, 127
      %v930 = vpop.permute.xlu0 %929
      %931 = vrot.lane.b32.xlu0 %v760, 127
      %v932 = vpop.permute.xlu0 %931
      %933 = vrot.lane.b32.xlu0 %v761, 127
      %v934 = vpop.permute.xlu0 %933
      %935 = vrot.lane.b32.xlu0 %v762, 127
      %v936 = vpop.permute.xlu0 %935
      %937 = vrot.lane.b32.xlu0 %v763, 127
      %v938 = vpop.permute.xlu0 %937
      %939 = vrot.lane.b32.xlu0 %v764, 127
      %v940 = vpop.permute.xlu0 %939
      %v941 = vsel %vm412, %v926, %v928
      %v942 = vsel %vm412, %v930, %v932
      %v943 = vsel %vm412, %v934, %v936
      %v944 = vsel %vm412, %v938, %v940
      %v953 = vsel %vm412, %v928, 0.0
      %v954 = vsel %vm412, %v932, 0.0
      %v955 = vsel %vm412, %v936, 0.0
      %v956 = vsel %vm412, %v940, 0.0
      %v957 = vsel %vm220, %v941, 0.0
      %v958 = vsel %vm221, %v953, 0.0
      %v959 = vsel %vm220, %v942, 0.0
      %v960 = vsel %vm221, %v954, 0.0
      %v961 = vsel %vm220, %v943, 0.0
      %v962 = vsel %vm221, %v955, 0.0
      %v963 = vsel %vm220, %v944, 0.0
      %v964 = vsel %vm221, %v956, 0.0
      %965 = vrot.lane.b32.xlu0 %v757, 113
      %v966 = vpop.permute.xlu0 %965
      %967 = vrot.lane.b32.xlu0 %v758, 113
      %v968 = vpop.permute.xlu0 %967
      %969 = vrot.lane.b32.xlu0 %v759, 113
      %v970 = vpop.permute.xlu0 %969
      %971 = vrot.lane.b32.xlu0 %v760, 113
      %v972 = vpop.permute.xlu0 %971
      %973 = vrot.lane.b32.xlu0 %v761, 113
      %v974 = vpop.permute.xlu0 %973
      %975 = vrot.lane.b32.xlu0 %v762, 113
      %v976 = vpop.permute.xlu0 %975
      %977 = vrot.lane.b32.xlu0 %v763, 113
      %v978 = vpop.permute.xlu0 %977
      %979 = vrot.lane.b32.xlu0 %v764, 113
      %v980 = vpop.permute.xlu0 %979
      %v981 = vsel %vm453, %v966, %v968
      %v982 = vsel %vm453, %v970, %v972
      %v983 = vsel %vm453, %v974, %v976
      %v984 = vsel %vm453, %v978, %v980
      %v993 = vsel %vm453, %v968, 0.0
      %v994 = vsel %vm453, %v972, 0.0
      %v995 = vsel %vm453, %v976, 0.0
      %v996 = vsel %vm453, %v980, 0.0
      %v997 = vsel %vm222, %v981, 0.0
      %v998 = vsel %vm223, %v993, 0.0
      %v999 = vsel %vm222, %v982, 0.0
      %v1000 = vsel %vm223, %v994, 0.0
      %v1001 = vsel %vm222, %v983, 0.0
      %v1002 = vsel %vm223, %v995, 0.0
      %v1003 = vsel %vm222, %v984, 0.0
      %v1004 = vsel %vm223, %v996, 0.0
      %1005 = vrot.lane.b32.xlu0 %v757, 112
      %v1006 = vpop.permute.xlu0 %1005
      %1007 = vrot.lane.b32.xlu0 %v758, 112
      %v1008 = vpop.permute.xlu0 %1007
      %1009 = vrot.lane.b32.xlu0 %v759, 112
      %v1010 = vpop.permute.xlu0 %1009
      %1011 = vrot.lane.b32.xlu0 %v760, 112
      %v1012 = vpop.permute.xlu0 %1011
      %1013 = vrot.lane.b32.xlu0 %v761, 112
      %v1014 = vpop.permute.xlu0 %1013
      %1015 = vrot.lane.b32.xlu0 %v762, 112
      %v1016 = vpop.permute.xlu0 %1015
      %1017 = vrot.lane.b32.xlu0 %v763, 112
      %v1018 = vpop.permute.xlu0 %1017
      %1019 = vrot.lane.b32.xlu0 %v764, 112
      %v1020 = vpop.permute.xlu0 %1019
      %v1021 = vsel %vm494, %v1006, %v1008
      %v1022 = vsel %vm494, %v1010, %v1012
      %v1023 = vsel %vm494, %v1014, %v1016
      %v1024 = vsel %vm494, %v1018, %v1020
      %v1033 = vsel %vm494, %v1008, 0.0
      %v1034 = vsel %vm494, %v1012, 0.0
      %v1035 = vsel %vm494, %v1016, 0.0
      %v1036 = vsel %vm494, %v1020, 0.0
      %1037 = vrot.lane.b32.xlu0 %v757, 111
      %v1038 = vpop.permute.xlu0 %1037
      %1039 = vrot.lane.b32.xlu0 %v758, 111
      %v1040 = vpop.permute.xlu0 %1039
      %1041 = vrot.lane.b32.xlu0 %v759, 111
      %v1042 = vpop.permute.xlu0 %1041
      %1043 = vrot.lane.b32.xlu0 %v760, 111
      %v1044 = vpop.permute.xlu0 %1043
      %1045 = vrot.lane.b32.xlu0 %v761, 111
      %v1046 = vpop.permute.xlu0 %1045
      %1047 = vrot.lane.b32.xlu0 %v762, 111
      %v1048 = vpop.permute.xlu0 %1047
      %1049 = vrot.lane.b32.xlu0 %v763, 111
      %v1050 = vpop.permute.xlu0 %1049
      %1051 = vrot.lane.b32.xlu0 %v764, 111
      %v1052 = vpop.permute.xlu0 %1051
      %v1053 = vsel %vm527, %v1038, %v1040
      %v1054 = vsel %vm527, %v1042, %v1044
      %v1055 = vsel %vm527, %v1046, %v1048
      %v1056 = vsel %vm527, %v1050, %v1052
      %v1065 = vsel %vm527, %v1040, 0.0
      %v1066 = vsel %vm527, %v1044, 0.0
      %v1067 = vsel %vm527, %v1048, 0.0
      %v1068 = vsel %vm527, %v1052, 0.0
      %v1069 = vsel %vm220, %v1053, 0.0
      %v1070 = vsel %vm221, %v1065, 0.0
      %v1071 = vsel %vm220, %v1054, 0.0
      %v1072 = vsel %vm221, %v1066, 0.0
      %v1073 = vsel %vm220, %v1055, 0.0
      %v1074 = vsel %vm221, %v1067, 0.0
      %v1075 = vsel %vm220, %v1056, 0.0
      %v1076 = vsel %vm221, %v1068, 0.0
      %v1078 = vsel %vm552, %v184, 0
      %1080 = vmatpush.msra.mxu0 %v923
      %1081 = vmatpush.msra.mxu0 %v921
      %1082 = vmatpush.msra.mxu0 %v919
      %1083 = vmatpush.msra.mxu0 %v917
      %1084 = vmatpush.msra.mxu0 %v883
      %1085 = vmatpush.msra.mxu0 %v881
      %1086 = vmatpush.msra.mxu0 %v879
      %1087 = vmatpush.msra.mxu0 %v877
      %1088 = vmatpush.msra.mxu0 %v844
      %1089 = vmatpush.msra.mxu0 %v843
      %1090 = vmatpush.msra.mxu0 %v842
      %1091 = vmatpush.msra.mxu0 %v841
      %1092 = vmatpush.msra.mxu0 %v811
      %1093 = vmatpush.msra.mxu0 %v809
      %1094 = vmatpush.msra.mxu0 %v807
      %1095 = vmatpush.msra.mxu0 %v805
      %1096 = vmatmul.f32.gmra.mxu0 %v182
      %v1097 = vpop.f32.mrf.mxu0
      %v1098 = vadd.f32 0.0, %v1097
      %1099 = vdwg.mxu0
      %1100 = vmatpush.msra.mxu0 %v1024
      %1101 = vmatpush.msra.mxu0 %v1023
      %1102 = vmatpush.msra.mxu0 %v1022
      %1103 = vmatpush.msra.mxu0 %v1021
      %1104 = vmatpush.msra.mxu0 %v1003
      %1105 = vmatpush.msra.mxu0 %v1001
      %1106 = vmatpush.msra.mxu0 %v999
      %1107 = vmatpush.msra.mxu0 %v997
      %1108 = vmatpush.msra.mxu0 %v963
      %1109 = vmatpush.msra.mxu0 %v961
      %1110 = vmatpush.msra.mxu0 %v959
      %1111 = vmatpush.msra.mxu0 %v957
      %1112 = vmatpush.msra.mxu0 %v763
      %1113 = vmatpush.msra.mxu0 %v761
      %1114 = vmatpush.msra.mxu0 %v759
      %1115 = vmatpush.msra.mxu0 %v757
      %1116 = vmatmul.f32.gmra.mxu0 %v183
      %v1117 = vpop.f32.mrf.mxu0
      %v1118 = vadd.f32 %v1098, %v1117
      %1119 = vdwg.mxu0
      %1120 = vmatpush.msra.mxu0 0.0
      %1121 = vmatpush.msra.mxu0 0.0
      %1122 = vmatpush.msra.mxu0 0.0
      %1123 = vmatpush.msra.mxu0 0.0
      %1124 = vmatpush.msra.mxu0 0.0
      %1125 = vmatpush.msra.mxu0 0.0
      %1126 = vmatpush.msra.mxu0 0.0
      %1127 = vmatpush.msra.mxu0 0.0
      %1128 = vmatpush.msra.mxu0 0.0
      %1129 = vmatpush.msra.mxu0 0.0
      %1130 = vmatpush.msra.mxu0 0.0
      %1131 = vmatpush.msra.mxu0 0.0
      %1132 = vmatpush.msra.mxu0 %v1075
      %1133 = vmatpush.msra.mxu0 %v1073
      %1134 = vmatpush.msra.mxu0 %v1071
      %1135 = vmatpush.msra.mxu0 %v1069
      %1136 = vmatmul.f32.gmra.mxu0 %v1078
      %v1137 = vpop.f32.mrf.mxu0
      %v1138 = vadd.f32 %v1118, %v1137
      %1139 = vdwg.mxu0
      %1140 = vmatpush.msra.mxu0 %v924
      %1141 = vmatpush.msra.mxu0 %v922
      %1142 = vmatpush.msra.mxu0 %v920
      %1143 = vmatpush.msra.mxu0 %v918
      %1144 = vmatpush.msra.mxu0 %v884
      %1145 = vmatpush.msra.mxu0 %v882
      %1146 = vmatpush.msra.mxu0 %v880
      %1147 = vmatpush.msra.mxu0 %v878
      %1148 = vmatpush.msra.mxu0 %v832
      %1149 = vmatpush.msra.mxu0 %v831
      %1150 = vmatpush.msra.mxu0 %v830
      %1151 = vmatpush.msra.mxu0 %v829
      %1152 = vmatpush.msra.mxu0 %v812
      %1153 = vmatpush.msra.mxu0 %v810
      %1154 = vmatpush.msra.mxu0 %v808
      %1155 = vmatpush.msra.mxu0 %v806
      %1156 = vmatmul.f32.gmra.mxu0 %v182
      %v1157 = vpop.f32.mrf.mxu0
      %v1158 = vadd.f32 0.0, %v1157
      %1159 = vdwg.mxu0
      %1160 = vmatpush.msra.mxu0 %v1036
      %1161 = vmatpush.msra.mxu0 %v1035
      %1162 = vmatpush.msra.mxu0 %v1034
      %1163 = vmatpush.msra.mxu0 %v1033
      %1164 = vmatpush.msra.mxu0 %v1004
      %1165 = vmatpush.msra.mxu0 %v1002
      %1166 = vmatpush.msra.mxu0 %v1000
      %1167 = vmatpush.msra.mxu0 %v998
      %1168 = vmatpush.msra.mxu0 %v964
      %1169 = vmatpush.msra.mxu0 %v962
      %1170 = vmatpush.msra.mxu0 %v960
      %1171 = vmatpush.msra.mxu0 %v958
      %1172 = vmatpush.msra.mxu0 %v764
      %1173 = vmatpush.msra.mxu0 %v762
      %1174 = vmatpush.msra.mxu0 %v760
      %1175 = vmatpush.msra.mxu0 %v758
      %1176 = vmatmul.f32.gmra.mxu0 %v183
      %v1177 = vpop.f32.mrf.mxu0
      %v1178 = vadd.f32 %v1158, %v1177
      %1179 = vdwg.mxu0
      %1180 = vmatpush.msra.mxu0 0.0
      %1181 = vmatpush.msra.mxu0 0.0
      %1182 = vmatpush.msra.mxu0 0.0
      %1183 = vmatpush.msra.mxu0 0.0
      %1184 = vmatpush.msra.mxu0 0.0
      %1185 = vmatpush.msra.mxu0 0.0
      %1186 = vmatpush.msra.mxu0 0.0
      %1187 = vmatpush.msra.mxu0 0.0
      %1188 = vmatpush.msra.mxu0 0.0
      %1189 = vmatpush.msra.mxu0 0.0
      %1190 = vmatpush.msra.mxu0 0.0
      %1191 = vmatpush.msra.mxu0 0.0
      %1192 = vmatpush.msra.mxu0 %v1076
      %1193 = vmatpush.msra.mxu0 %v1074
      %1194 = vmatpush.msra.mxu0 %v1072
      %1195 = vmatpush.msra.mxu0 %v1070
      %1196 = vmatmul.f32.gmra.mxu0 %v1078
      %v1197 = vpop.f32.mrf.mxu0
      %v1198 = vadd.f32 %v1178, %v1197
      %1199 = vdwg.mxu0
      %v1200 = vmax.f32 %v1138, 0.0
      %v1201 = vmax.f32 %v1198, 0.0
      %v1203 = vsel %vm678, %v189, 0
      %v1206 = vsel %vm678, %v190, 0
      %v1209 = vsel %vm678, %v191, 0
      %v1212 = vsel %vm678, %v192, 0
      %1214 = vmatpush.msra.mxu0 0.0
      %1215 = vmatpush.msra.mxu0 0.0
      %1216 = vmatpush.msra.mxu0 0.0
      %1217 = vmatpush.msra.mxu0 0.0
      %1218 = vmatpush.msra.mxu0 0.0
      %1219 = vmatpush.msra.mxu0 0.0
      %1220 = vmatpush.msra.mxu0 0.0
      %1221 = vmatpush.msra.mxu0 0.0
      %1222 = vmatpush.msra.mxu0 0.0
      %1223 = vmatpush.msra.mxu0 0.0
      %1224 = vmatpush.msra.mxu0 0.0
      %1225 = vmatpush.msra.mxu0 0.0
      %1226 = vmatpush.msra.mxu0 0.0
      %1227 = vmatpush.msra.mxu0 0.0
      %1228 = vmatpush.msra.mxu0 0.0
      %1229 = vmatpush.msra.mxu0 %v1200
      %1230 = vmatmul.f32.gmra.mxu0 %v1203
      %v1231 = vpop.f32.mrf.mxu0
      %v1232 = vadd.f32 0.0, %v1231
      %1233 = vmatmul.f32.gmra.mxu0 %v1206
      %v1234 = vpop.f32.mrf.mxu0
      %v1235 = vadd.f32 0.0, %v1234
      %1236 = vmatmul.f32.gmra.mxu0 %v1209
      %v1237 = vpop.f32.mrf.mxu0
      %v1238 = vadd.f32 0.0, %v1237
      %1239 = vmatmul.f32.gmra.mxu0 %v1212
      %v1240 = vpop.f32.mrf.mxu0
      %v1241 = vadd.f32 0.0, %v1240
      %1242 = vdwg.mxu0
      %1243 = vmatpush.msra.mxu0 0.0
      %1244 = vmatpush.msra.mxu0 0.0
      %1245 = vmatpush.msra.mxu0 0.0
      %1246 = vmatpush.msra.mxu0 0.0
      %1247 = vmatpush.msra.mxu0 0.0
      %1248 = vmatpush.msra.mxu0 0.0
      %1249 = vmatpush.msra.mxu0 0.0
      %1250 = vmatpush.msra.mxu0 0.0
      %1251 = vmatpush.msra.mxu0 0.0
      %1252 = vmatpush.msra.mxu0 0.0
      %1253 = vmatpush.msra.mxu0 0.0
      %1254 = vmatpush.msra.mxu0 0.0
      %1255 = vmatpush.msra.mxu0 0.0
      %1256 = vmatpush.msra.mxu0 0.0
      %1257 = vmatpush.msra.mxu0 0.0
      %1258 = vmatpush.msra.mxu0 %v1201
      %1259 = vmatmul.f32.gmra.mxu0 %v1203
      %v1260 = vpop.f32.mrf.mxu0
      %v1261 = vadd.f32 0.0, %v1260
      %1262 = vmatmul.f32.gmra.mxu0 %v1206
      %v1263 = vpop.f32.mrf.mxu0
      %v1264 = vadd.f32 0.0, %v1263
      %1265 = vmatmul.f32.gmra.mxu0 %v1209
      %v1266 = vpop.f32.mrf.mxu0
      %v1267 = vadd.f32 0.0, %v1266
      %1268 = vmatmul.f32.gmra.mxu0 %v1212
      %v1269 = vpop.f32.mrf.mxu0
      %v1270 = vadd.f32 0.0, %v1269
      %1271 = vdwg.mxu0
      %v1272 = vadd.f32 %v749, %v1232
      %v1273 = vadd.f32 %v750, %v1261
      %v1274 = vadd.f32 %v751, %v1235
      %v1275 = vadd.f32 %v752, %v1264
      %v1276 = vadd.f32 %v753, %v1238
      %v1277 = vadd.f32 %v754, %v1267
      %v1278 = vadd.f32 %v755, %v1241
      %v1279 = vadd.f32 %v756, %v1270
      %v1280 = vmax.f32 %v1272, 0.0
      %v1281 = vmax.f32 %v1273, 0.0
      %v1282 = vmax.f32 %v1274, 0.0
      %v1283 = vmax.f32 %v1275, 0.0
      %v1284 = vmax.f32 %v1276, 0.0
      %v1285 = vmax.f32 %v1277, 0.0
      %v1286 = vmax.f32 %v1278, 0.0
      %v1287 = vmax.f32 %v1279, 0.0
      %1288 = vst [vmem:[%s170] sm:$0xff] %v1280
      %1289 = vst [vmem:[%s170 + $0x8] sm:$0xff] %v1281
      %1290 = vst [vmem:[%s170 + $0x10] sm:$0xff] %v1282
      %1291 = vst [vmem:[%s170 + $0x18] sm:$0xff] %v1283
      %1292 = vst [vmem:[%s170 + $0x20] sm:$0xff] %v1284
      %1293 = vst [vmem:[%s170 + $0x28] sm:$0xff] %v1285
      %1294 = vst [vmem:[%s170 + $0x30] sm:$0xff] %v1286
      %1295 = vst [vmem:[%s170 + $0x38] sm:$0xff] %v1287
      %p1296 = scmp.lt.s32.totalorder %s14, 1
      %s1297 = scalar_select %p1296, %s14, 1
      %s1298 = smul.addr %s1297, 8
      %s1299 = smul.addr %s1298, 8
      %s1300 = scalar_lea.vmem %s3, %s1299
      // Predicated region
      $region33: #{residual_stack_forward.1} parent=31 // pred_check
        %p1301 = pneg %p100
      $region34: #{residual_stack_forward.1} parent=31 // pred_check_branch
        %1303 = sbr.rel (%p1301) target = $region36
      $region35: #{residual_stack_forward.1} parent=31 // pred_region
        _
      $region36: #{residual_stack_forward.1} parent=31 // pred_fallthru
        _
    $region32: #{residual_stack_forward.1} parent=5 // pred_fallthru
      _
    %p1304 = scmp.le.s32.totalorder 2, %s9
    // Predicated region
    $region37: #{residual_stack_forward.1} parent=5 // pred_check
      %p1305 = pneg %p1304
    $region38: #{residual_stack_forward.1} parent=5 // pred_check_branch
      %1307 = sbr.rel (%p1305) target = $region40
    $region39: #{residual_stack_forward.1} parent=5 // pred_region
      %s1308 = ssub.s32 %s9, 2
      // Predicated region
      $region41: #{residual_stack_forward.1} parent=39 // pred_check
        %p1309 = pneg %p106
      $region42: #{residual_stack_forward.1} parent=39 // pred_check_branch
        %1311 = sbr.rel (%p1309) target = $region44
      $region43: #{residual_stack_forward.1} parent=39 // pred_region
        %p1312 = scmp.lt.s32.totalorder %s15, 1
        %s1313 = scalar_select %p1312, %s15, 1
        %s1314 = smul.addr %s1313, 8
        %s1315 = smul.addr %s1314, 8
        %s1316 = scalar_lea.vmem %s3, %s1315
      $region44: #{residual_stack_forward.1} parent=39 // pred_fallthru
        _
    $region40: #{residual_stack_forward.1} parent=5 // pred_fallthru
      _
  $region6: #{residual_stack_forward.1} parent=0 // loop_footer
    %s13 = sadd.s32 1, %s9
  $region7: #{residual_stack_forward.1} parent=0 // loop_footer_branch
    %8 = sbr.rel target = $region3
  $region8: #{residual_stack_forward.1} parent=0 // loop_exit
    _

</llo_original>
